<compile_context>
chip_gen: v6e
topology: v6e:2x2x1
jax: 0.10.0
libtpu: 0.0.40
codegen_flags: <defaults>
</compile_context>

<pallas_src>
import functools

import jax
import jax.numpy as jnp
from jax import lax
from jax.experimental import pallas as pl
from jax.experimental.pallas import tpu as pltpu  # noqa: F401  (TPU backend)

# ---- hyperparameters implied by the module ---------------------------------
NUM_EMBEDDINGS = 32   # C
CONTEXT_SIZE   = 8    # T
HEAD_SIZE      = 16   # H
BATCH          = 2    # B
DROPOUT        = 0.1  # unused at inference


def _head_kernel(x_ref, w_ref, o_ref, *, B, T, H):
    # x_ref: (B*T, C) flattened batch+seq, w_ref: (C, 3H) = [Wk | Wq | Wv],
    # o_ref: (B*T, H)
    x = x_ref[...].astype(jnp.float32)                                # (B*T, C)
    w = w_ref[...].astype(jnp.float32)                                # (C, 3H)

    # Single fused projection matmul for K, Q, V of every batch element.
    kqv = jnp.dot(x, w, preferred_element_type=jnp.float32)           # (B*T, 3H)
    k = kqv[:, 0:H]
    q = kqv[:, H:2 * H]
    v = kqv[:, 2 * H:3 * H]

    scale = H ** (-0.5)

    # Causal (tril) mask built in-kernel; hoisted out of the batch loop.
    row = lax.broadcasted_iota(jnp.int32, (T, T), 0)
    col = lax.broadcasted_iota(jnp.int32, (T, T), 1)
    keep = row >= col                                                  # tril == 1

    outs = []
    for b in range(B):  # B is tiny and static -> fully unrolled
        kb = k[b * T:(b + 1) * T, :]                                   # (T, H)
        qb = q[b * T:(b + 1) * T, :]                                   # (T, H)
        vb = v[b * T:(b + 1) * T, :]                                   # (T, H)

        # q @ k.T expressed via dot_general (contract last dims; no explicit
        # XLU transpose).
        att = lax.dot_general(
            qb, kb, (((1,), (1,)), ((), ())),
            preferred_element_type=jnp.float32) * scale                # (T, T)

        # masked_fill(tril == 0, -inf)
        att = jnp.where(keep, att, -jnp.inf)

        # PyTorch softmax(dim=1) on (B, T, T) -> normalize over the ROW axis
        # of the per-batch (T, T) matrix (axis=0 here).
        m = jnp.max(att, axis=0, keepdims=True)                        # (1, T)
        e = jnp.exp(att - m)                                           # (T, T)
        s = jnp.sum(e, axis=0, keepdims=True)                          # (1, T)
        att = e * pl.reciprocal(s, approx=True)                        # EUP recip

        outs.append(jnp.dot(att, vb, preferred_element_type=jnp.float32))

    o_ref[...] = jnp.concatenate(outs, axis=0).astype(o_ref.dtype)     # (B*T, H)


def head_forward(x, wk, wq, wv):
    B, T, C = x.shape
    H = wk.shape[1]

    x2d = x.reshape(B * T, C)
    w_qkv = jnp.concatenate([wk, wq, wv], axis=1)                      # (C, 3H)

    flops = 2 * (B * T) * C * (3 * H) + B * (2 * 2 * T * T * H)
    transcendentals = B * T * T + B * T                                # exp + recip
    bytes_accessed = 4 * (B * T * C + C * 3 * H + B * T * H)

    out2d = pl.pallas_call(
        functools.partial(_head_kernel, B=B, T=T, H=H),
        out_shape=jax.ShapeDtypeStruct((B * T, H), x.dtype),
        in_specs=[
            pl.BlockSpec((B * T, C), lambda: (0, 0)),
            pl.BlockSpec((C, 3 * H), lambda: (0, 0)),
        ],
        out_specs=pl.BlockSpec((B * T, H), lambda: (0, 0)),
        cost_estimate=pl.CostEstimate(
            flops=flops,
            transcendentals=transcendentals,
            bytes_accessed=bytes_accessed,
        ),
    )(x2d, w_qkv)

    return out2d.reshape(B, T, H)


def head_reference(x, wk, wq, wv):
    # pure-JAX reference of the exact PyTorch forward (eval mode)
    k = x @ wk
    q = x @ wq
    v = x @ wv
    att = (q @ jnp.swapaxes(k, -2, -1)) * (k.shape[-1] ** -0.5)
    T = x.shape[1]
    tril = jnp.tril(jnp.ones((T, T), jnp.float32))
    att = jnp.where(tril[None, :, :] == 0.0, -jnp.inf, att)
    att = jax.nn.softmax(att, axis=1)      # note: dim=1 as in the PyTorch code
    return att @ v


if __name__ == "__main__":
    key = jax.random.PRNGKey(0)
    kx, kk, kq, kv = jax.random.split(key, 4)

    # deterministic inputs / parameters
    x = jax.random.normal(kx, (BATCH, CONTEXT_SIZE, NUM_EMBEDDINGS), jnp.float32)
    # nn.Linear(num_embeddings, head_size, bias=False): weight (H, C); we store W^T = (C, H)
    wk = jax.random.normal(kk, (NUM_EMBEDDINGS, HEAD_SIZE), jnp.float32) * 0.02
    wq = jax.random.normal(kq, (NUM_EMBEDDINGS, HEAD_SIZE), jnp.float32) * 0.02
    wv = jax.random.normal(kv, (NUM_EMBEDDINGS, HEAD_SIZE), jnp.float32) * 0.02

    out = head_forward(x, wk, wq, wv)
    out = jax.block_until_ready(out)

    ref = head_reference(x, wk, wq, wv)
    assert out.shape == (BATCH, CONTEXT_SIZE, HEAD_SIZE)
    # tolerance slightly relaxed because of the EUP approximate reciprocal
    assert jnp.allclose(out, ref, atol=1e-3, rtol=1e-3), "mismatch vs reference"

    print("KERNEL_OK")
</pallas_src>

<mosaic_0001>
module attributes {stable_mosaic.version = 11 : i64} {
  func.func @_head_kernel(%arg0: memref<16x32xf32, #tpu.memory_space<vmem>>, %arg1: memref<32x48xf32, #tpu.memory_space<vmem>>, %arg2: memref<16x16xf32, #tpu.memory_space<vmem>>) attributes {dimension_semantics = [], scalar_prefetch = 0 : i64, scratch_operands = 0 : i64, tpu.core_type = #tpu.core_type<tc>} {
    %c0 = arith.constant 0 : index
    %c0_0 = arith.constant 0 : index
    %0 = vector.load %arg0[%c0, %c0_0] : memref<16x32xf32, #tpu.memory_space<vmem>>, vector<16x32xf32>
    %c0_1 = arith.constant 0 : index
    %c0_2 = arith.constant 0 : index
    %1 = vector.load %arg1[%c0_1, %c0_2] : memref<32x48xf32, #tpu.memory_space<vmem>>, vector<32x48xf32>
    %cst = arith.constant dense<0.000000e+00> : vector<16x48xf32>
    %2 = tpu.matmul %0, %1, %cst {dimension_numbers = #tpu.dot_dimension_numbers<[1], [0], [0], [1], [0, 0, 1, 1], [], []>} : vector<16x32xf32>, vector<32x48xf32>, vector<16x48xf32> -> vector<16x48xf32>
    %3 = vector.extract_strided_slice %2 {offsets = [0, 0], sizes = [16, 16], strides = [1, 1]} : vector<16x48xf32> to vector<16x16xf32>
    %4 = vector.extract_strided_slice %2 {offsets = [0, 16], sizes = [16, 16], strides = [1, 1]} : vector<16x48xf32> to vector<16x16xf32>
    %5 = vector.extract_strided_slice %2 {offsets = [0, 32], sizes = [16, 16], strides = [1, 1]} : vector<16x48xf32> to vector<16x16xf32>
    %6 = tpu.iota {dimensions = array<i32: 0>} : vector<8x8xi32>
    %7 = tpu.iota {dimensions = array<i32: 1>} : vector<8x8xi32>
    %8 = arith.cmpi sge, %6, %7 : vector<8x8xi32>
    %9 = vector.extract_strided_slice %3 {offsets = [0, 0], sizes = [8, 16], strides = [1, 1]} : vector<16x16xf32> to vector<8x16xf32>
    %10 = vector.extract_strided_slice %4 {offsets = [0, 0], sizes = [8, 16], strides = [1, 1]} : vector<16x16xf32> to vector<8x16xf32>
    %11 = vector.extract_strided_slice %5 {offsets = [0, 0], sizes = [8, 16], strides = [1, 1]} : vector<16x16xf32> to vector<8x16xf32>
    %cst_3 = arith.constant dense<0.000000e+00> : vector<8x8xf32>
    %12 = tpu.matmul %10, %9, %cst_3 {dimension_numbers = #tpu.dot_dimension_numbers<[1], [1], [0], [0], [0, 0, 1, 0], [], []>} : vector<8x16xf32>, vector<8x16xf32>, vector<8x8xf32> -> vector<8x8xf32>
    %cst_4 = arith.constant 2.500000e-01 : f32
    %13 = vector.broadcast %cst_4 : f32 to vector<8x8xf32>
    %14 = arith.mulf %12, %13 : vector<8x8xf32>
    %cst_5 = arith.constant 0xFF800000 : f32
    %15 = vector.broadcast %cst_5 : f32 to vector<8x8xf32>
    %16 = arith.select %8, %14, %15 : vector<8x8xi1>, vector<8x8xf32>
    %cst_6 = arith.constant dense<0xFF800000> : vector<8xf32>
    %17 = vector.multi_reduction <maximumf>, %16, %cst_6 [0] : vector<8x8xf32> to vector<8xf32>
    %18 = vector.shape_cast %17 : vector<8xf32> to vector<1x8xf32>
    %19 = vector.broadcast %18 : vector<1x8xf32> to vector<8x8xf32>
    %20 = arith.subf %16, %19 : vector<8x8xf32>
    %21 = math.exp %20 : vector<8x8xf32>
    %cst_7 = arith.constant dense<0.000000e+00> : vector<8xf32>
    %22 = vector.multi_reduction <add>, %21, %cst_7 [0] : vector<8x8xf32> to vector<8xf32>
    %23 = vector.shape_cast %22 : vector<8xf32> to vector<1x8xf32>
    %24 = tpu.reciprocal %23 {approx = true} : vector<1x8xf32> -> vector<1x8xf32>
    %25 = vector.broadcast %24 : vector<1x8xf32> to vector<8x8xf32>
    %26 = arith.mulf %21, %25 : vector<8x8xf32>
    %cst_8 = arith.constant dense<0.000000e+00> : vector<8x16xf32>
    %27 = tpu.matmul %26, %11, %cst_8 {dimension_numbers = #tpu.dot_dimension_numbers<[1], [0], [0], [1], [0, 0, 1, 1], [], []>} : vector<8x8xf32>, vector<8x16xf32>, vector<8x16xf32> -> vector<8x16xf32>
    %28 = vector.extract_strided_slice %3 {offsets = [8, 0], sizes = [8, 16], strides = [1, 1]} : vector<16x16xf32> to vector<8x16xf32>
    %29 = vector.extract_strided_slice %4 {offsets = [8, 0], sizes = [8, 16], strides = [1, 1]} : vector<16x16xf32> to vector<8x16xf32>
    %30 = vector.extract_strided_slice %5 {offsets = [8, 0], sizes = [8, 16], strides = [1, 1]} : vector<16x16xf32> to vector<8x16xf32>
    %cst_9 = arith.constant dense<0.000000e+00> : vector<8x8xf32>
    %31 = tpu.matmul %29, %28, %cst_9 {dimension_numbers = #tpu.dot_dimension_numbers<[1], [1], [0], [0], [0, 0, 1, 0], [], []>} : vector<8x16xf32>, vector<8x16xf32>, vector<8x8xf32> -> vector<8x8xf32>
    %cst_10 = arith.constant 2.500000e-01 : f32
    %32 = vector.broadcast %cst_10 : f32 to vector<8x8xf32>
    %33 = arith.mulf %31, %32 : vector<8x8xf32>
    %cst_11 = arith.constant 0xFF800000 : f32
    %34 = vector.broadcast %cst_11 : f32 to vector<8x8xf32>
    %35 = arith.select %8, %33, %34 : vector<8x8xi1>, vector<8x8xf32>
    %cst_12 = arith.constant dense<0xFF800000> : vector<8xf32>
    %36 = vector.multi_reduction <maximumf>, %35, %cst_12 [0] : vector<8x8xf32> to vector<8xf32>
    %37 = vector.shape_cast %36 : vector<8xf32> to vector<1x8xf32>
    %38 = vector.broadcast %37 : vector<1x8xf32> to vector<8x8xf32>
    %39 = arith.subf %35, %38 : vector<8x8xf32>
    %40 = math.exp %39 : vector<8x8xf32>
    %cst_13 = arith.constant dense<0.000000e+00> : vector<8xf32>
    %41 = vector.multi_reduction <add>, %40, %cst_13 [0] : vector<8x8xf32> to vector<8xf32>
    %42 = vector.shape_cast %41 : vector<8xf32> to vector<1x8xf32>
    %43 = tpu.reciprocal %42 {approx = true} : vector<1x8xf32> -> vector<1x8xf32>
    %44 = vector.broadcast %43 : vector<1x8xf32> to vector<8x8xf32>
    %45 = arith.mulf %40, %44 : vector<8x8xf32>
    %cst_14 = arith.constant dense<0.000000e+00> : vector<8x16xf32>
    %46 = tpu.matmul %45, %30, %cst_14 {dimension_numbers = #tpu.dot_dimension_numbers<[1], [0], [0], [1], [0, 0, 1, 1], [], []>} : vector<8x8xf32>, vector<8x16xf32>, vector<8x16xf32> -> vector<8x16xf32>
    %47 = tpu.concatenate %27, %46 in 0 : vector<8x16xf32>, vector<8x16xf32> -> vector<16x16xf32>
    %c0_15 = arith.constant 0 : index
    %c0_16 = arith.constant 0 : index
    %48 = vector.load %arg2[%c0_15, %c0_16] : memref<16x16xf32, #tpu.memory_space<vmem>>, vector<16x16xf32>
    tpu.vector_store %arg2[%c0_15, %c0_16], %47 {strides = array<i32>} : memref<16x16xf32, #tpu.memory_space<vmem>>, vector<16x16xf32>,
    return
  }
}

</mosaic_0001>

<llo_original>
// kernel: tpu_custom_call.1
$region0: #{tpu_custom_call.1}
  #allocation0 [shape = 'u32[]', space=smem, size = 0x4, offset = 0x4, fixed_abs, tag = 'smem constant byte address 0x4 - core index']
  #allocation1 [shape = 'u32[144,128]{1,0:T(1,128)}', space=vmem, size = 0x12000, scoped, tag = 'internal scratch']
  %s0 = inlined_call_operand.hbm [shape: f32[16,32], index: 0, kind: input, shape index: {}]
  %s1 = inlined_call_operand.hbm [shape: f32[32,48], index: 1, kind: input, shape index: {}]
  %s2 = inlined_call_operand.hbm [shape: f32[16,16], index: 2, kind: output, shape index: {}]
  %s3 = sld [smem:[#allocation0]]
  $region26: #{tpu_custom_call.1} parent=0
    _
  %s5 = ssub.s32 1, %s3
  %s6 = scalar_select 0, %s5, %s3
  $region1: #{tpu_custom_call.1} parent=0
    #allocation2 [shape = 'u8[8192]{0}', space=vmem, size = 0x2000, scoped, tag = 'input window, operand 0, single buffered']
    #allocation3 [shape = 's32[1]{0}', space=sflag, size = 0x4, scoped, tag = 'scoped memory for tpu_custom_call.1']
    #allocation4 [shape = 's32[1]{0}', space=sflag, size = 0x4, scoped, tag = 'scoped memory for tpu_custom_call.1']
    #allocation5 [shape = 'u8[16384]{0}', space=vmem, size = 0x4000, scoped, tag = 'input window, operand 1, single buffered']
    #allocation6 [shape = 's32[1]{0}', space=sflag, size = 0x4, scoped, tag = 'scoped memory for tpu_custom_call.1']
    #allocation7 [shape = 'u8[8192]{0}', space=vmem, size = 0x2000, scoped, tag = 'output window, operand 0, single buffered']
    %7 = vsyncpa [#allocation3], 0
    %8 = vsyncpa [#allocation6], 0
    %9 = vsyncpa [#allocation4], 0
    // Predicated region
    $region2: #{tpu_custom_call.1} parent=1 // pred_check
      _
    $region3: #{tpu_custom_call.1} parent=1 // pred_check_branch
      %11 = sbr.rel (0) target = $region5
    $region4: #{tpu_custom_call.1} parent=1 // pred_region
      %s13 = ssub.s32 256, 256
      %14 = vsyncadd [#allocation3], %s13
      %s15 = sshll.u32 [#allocation2], 4
      %s16 = int_to_ptr.vmem [resolvable:$true] %s15
      %21 = dma.hbm_to_vmem [thread:$0]  %s0, 256, %s16, [#allocation3], 128, 128, 8
    $region5: #{tpu_custom_call.1} parent=1 // pred_fallthru
      _
    // Predicated region
    $region6: #{tpu_custom_call.1} parent=1 // pred_check
      _
    $region7: #{tpu_custom_call.1} parent=1 // pred_check_branch
      %23 = sbr.rel (0) target = $region9
    $region8: #{tpu_custom_call.1} parent=1 // pred_region
      %s25 = ssub.s32 512, 512
      %26 = vsyncadd [#allocation6], %s25
      %s27 = sshll.u32 [#allocation5], 4
      %s28 = int_to_ptr.vmem [resolvable:$true] %s27
      %33 = dma.hbm_to_vmem [thread:$0]  %s1, 512, %s28, [#allocation6], 128, 128, 8
    $region9: #{tpu_custom_call.1} parent=1 // pred_fallthru
      _
    // Predicated region
    $region10: #{tpu_custom_call.1} parent=1 // pred_check
      _
    $region11: #{tpu_custom_call.1} parent=1 // pred_check_branch
      %35 = sbr.rel (0) target = $region13
    $region12: #{tpu_custom_call.1} parent=1 // pred_region
      %36 = dma.done [#allocation3], 256
    $region13: #{tpu_custom_call.1} parent=1 // pred_fallthru
      _
    // Predicated region
    $region14: #{tpu_custom_call.1} parent=1 // pred_check
      _
    $region15: #{tpu_custom_call.1} parent=1 // pred_check_branch
      %38 = sbr.rel (0) target = $region17
    $region16: #{tpu_custom_call.1} parent=1 // pred_region
      %39 = dma.done [#allocation6], 512
    $region17: #{tpu_custom_call.1} parent=1 // pred_fallthru
      _
    %v40 = vld [vmem:[#allocation2] sm:$0xff]
    %v41 = vld [vmem:[#allocation2 + $0x8] sm:$0xff]
    %v42 = vld [vmem:[#allocation5] sm:$0xff]
    %v43 = vld [vmem:[#allocation5 + $0x8] sm:$0xff]
    %v44 = vld [vmem:[#allocation5 + $0x10] sm:$0xff]
    %v45 = vld [vmem:[#allocation5 + $0x18] sm:$0xff]
    %vm46 = vcmask 261120
    %v48 = vsel %vm46, %v40, 0
    %v51 = vsel %vm46, %v41, 0
    %53 = vmatprep.subr.mxu0 0.0
    %54 = vmatpush1.msra.mxu0 0.0
    %55 = vmatprep.subr.mxu0 0.0
    %56 = vmatpush1.msra.mxu0 0.0
    %57 = vmatprep.subr.mxu0 0.0
    %58 = vmatpush1.msra.mxu0 0.0
    %59 = vmatprep.subr.mxu0 0.0
    %60 = vmatpush1.msra.mxu0 0.0
    %61 = vmatprep.subr.mxu0 0.0
    %62 = vmatpush1.msra.mxu0 0.0
    %63 = vmatprep.subr.mxu0 0.0
    %64 = vmatpush1.msra.mxu0 0.0
    %65 = vmatprep.subr.mxu0 0.0
    %66 = vmatpush1.msra.mxu0 0.0
    %67 = vmatprep.subr.mxu0 0.0
    %68 = vmatpush1.msra.mxu0 0.0
    %69 = vmatprep.subr.mxu0 0.0
    %70 = vmatpush1.msra.mxu0 0.0
    %71 = vmatprep.subr.mxu0 0.0
    %72 = vmatpush1.msra.mxu0 0.0
    %73 = vmatprep.subr.mxu0 0.0
    %74 = vmatpush1.msra.mxu0 0.0
    %75 = vmatprep.subr.mxu0 0.0
    %76 = vmatpush1.msra.mxu0 0.0
    %77 = vmatprep.subr.mxu0 0.0
    %78 = vmatpush1.msra.mxu0 %v45
    %79 = vmatprep.subr.mxu0 0.0
    %80 = vmatpush1.msra.mxu0 %v44
    %81 = vmatprep.subr.mxu0 0.0
    %82 = vmatpush1.msra.mxu0 %v43
    %83 = vmatprep.subr.mxu0 0.0
    %84 = vmatpush1.msra.mxu0 %v42
    %85 = vmatprep.subr.mxu0 0.0
    %86 = vmatpush2.msra.mxu0 0.0
    %87 = vmatprep.subr.mxu0 0.0
    %88 = vmatpush2.msra.mxu0 0.0
    %89 = vmatprep.subr.mxu0 0.0
    %90 = vmatpush2.msra.mxu0 0.0
    %91 = vmatprep.subr.mxu0 0.0
    %92 = vmatpush2.msra.mxu0 0.0
    %93 = vmatprep.subr.mxu0 0.0
    %94 = vmatpush2.msra.mxu0 0.0
    %95 = vmatprep.subr.mxu0 0.0
    %96 = vmatpush2.msra.mxu0 0.0
    %97 = vmatprep.subr.mxu0 0.0
    %98 = vmatpush2.msra.mxu0 0.0
    %99 = vmatprep.subr.mxu0 0.0
    %100 = vmatpush2.msra.mxu0 0.0
    %101 = vmatprep.subr.mxu0 0.0
    %102 = vmatpush2.msra.mxu0 0.0
    %103 = vmatprep.subr.mxu0 0.0
    %104 = vmatpush2.msra.mxu0 0.0
    %105 = vmatprep.subr.mxu0 0.0
    %106 = vmatpush2.msra.mxu0 0.0
    %107 = vmatprep.subr.mxu0 0.0
    %108 = vmatpush2.msra.mxu0 0.0
    %109 = vmatprep.subr.mxu0 0.0
    %110 = vmatpush2.msra.mxu0 0.0
    %111 = vmatprep.subr.mxu0 0.0
    %112 = vmatpush2.msra.mxu0 0.0
    %113 = vmatprep.subr.mxu0 0.0
    %114 = vmatpush2.msra.mxu0 0.0
    %115 = vmatprep.subr.mxu0 0.0
    %116 = vmatpush2.msra.mxu0 0.0
    %117 = vmatprep.mubr.f32.mxu0 0.0
    %118 = vmatmul.mubr.f32.gmra.mxu0 %v48
    %v119 = vpop.f32.mrf.mxu0
    %v120 = vadd.f32 0.0, %v119
    %v121 = vpop.f32.mrf.mxu0
    %122 = vmatprep.mubr.f32.mxu0 0.0
    %123 = vmatmul.mubr.f32.gmra.mxu0 %v51
    %v124 = vpop.f32.mrf.mxu0
    %v125 = vadd.f32 0.0, %v124
    %v126 = vpop.f32.mrf.mxu0
    %127 = vdwg.mxu0
    %v128 = vlaneseq
    %v129 = vshrl.u32 %v128, 7
    %v130 = vlaneseq
    %v131 = vand.u32 %v130, 127
    %vm132 = vcmp.ge.s32.totalorder %v129, %v131
    %134 = vrot.lane.b32.xlu0 %v120, 112
    %v135 = vpop.permute.xlu0 %134
    %vm136 = vcmask 130048
    %v137 = vsel %vm136, %v135, 0
    %v139 = vsel %vm136, %v120, 0
    %141 = vmatprep.subr.mxu0 0.0
    %142 = vmatpush1.xpose.msra.mxu0 0.0
    %143 = vmatprep.subr.mxu0 0.0
    %144 = vmatpush1.xpose.msra.mxu0 0.0
    %145 = vmatprep.subr.mxu0 0.0
    %146 = vmatpush1.xpose.msra.mxu0 0.0
    %147 = vmatprep.subr.mxu0 0.0
    %148 = vmatpush1.xpose.msra.mxu0 0.0
    %149 = vmatprep.subr.mxu0 0.0
    %150 = vmatpush1.xpose.msra.mxu0 0.0
    %151 = vmatprep.subr.mxu0 0.0
    %152 = vmatpush1.xpose.msra.mxu0 0.0
    %153 = vmatprep.subr.mxu0 0.0
    %154 = vmatpush1.xpose.msra.mxu0 0.0
    %155 = vmatprep.subr.mxu0 0.0
    %156 = vmatpush1.xpose.msra.mxu0 0.0
    %157 = vmatprep.subr.mxu0 0.0
    %158 = vmatpush1.xpose.msra.mxu0 0.0
    %159 = vmatprep.subr.mxu0 0.0
    %160 = vmatpush1.xpose.msra.mxu0 0.0
    %161 = vmatprep.subr.mxu0 0.0
    %162 = vmatpush1.xpose.msra.mxu0 0.0
    %163 = vmatprep.subr.mxu0 0.0
    %164 = vmatpush1.xpose.msra.mxu0 0.0
    %165 = vmatprep.subr.mxu0 0.0
    %166 = vmatpush1.xpose.msra.mxu0 0.0
    %167 = vmatprep.subr.mxu0 0.0
    %168 = vmatpush1.xpose.msra.mxu0 0.0
    %169 = vmatprep.subr.mxu0 0.0
    %170 = vmatpush1.xpose.msra.mxu0 0.0
    %171 = vmatprep.subr.mxu0 0.0
    %172 = vmatpush1.xpose.msra.mxu0 %v139
    %173 = vmatprep.subr.mxu0 0.0
    %174 = vmatpush2.xpose.msra.mxu0 0.0
    %175 = vmatprep.subr.mxu0 0.0
    %176 = vmatpush2.xpose.msra.mxu0 0.0
    %177 = vmatprep.subr.mxu0 0.0
    %178 = vmatpush2.xpose.msra.mxu0 0.0
    %179 = vmatprep.subr.mxu0 0.0
    %180 = vmatpush2.xpose.msra.mxu0 0.0
    %181 = vmatprep.subr.mxu0 0.0
    %182 = vmatpush2.xpose.msra.mxu0 0.0
    %183 = vmatprep.subr.mxu0 0.0
    %184 = vmatpush2.xpose.msra.mxu0 0.0
    %185 = vmatprep.subr.mxu0 0.0
    %186 = vmatpush2.xpose.msra.mxu0 0.0
    %187 = vmatprep.subr.mxu0 0.0
    %188 = vmatpush2.xpose.msra.mxu0 0.0
    %189 = vmatprep.subr.mxu0 0.0
    %190 = vmatpush2.xpose.msra.mxu0 0.0
    %191 = vmatprep.subr.mxu0 0.0
    %192 = vmatpush2.xpose.msra.mxu0 0.0
    %193 = vmatprep.subr.mxu0 0.0
    %194 = vmatpush2.xpose.msra.mxu0 0.0
    %195 = vmatprep.subr.mxu0 0.0
    %196 = vmatpush2.xpose.msra.mxu0 0.0
    %197 = vmatprep.subr.mxu0 0.0
    %198 = vmatpush2.xpose.msra.mxu0 0.0
    %199 = vmatprep.subr.mxu0 0.0
    %200 = vmatpush2.xpose.msra.mxu0 0.0
    %201 = vmatprep.subr.mxu0 0.0
    %202 = vmatpush2.xpose.msra.mxu0 0.0
    %203 = vmatprep.subr.mxu0 0.0
    %204 = vmatpush2.xpose.msra.mxu0 0.0
    %205 = vmatprep.mubr.f32.mxu0 0.0
    %206 = vmatmul.mubr.f32.gmra.mxu0 %v137
    %v207 = vpop.f32.mrf.mxu0
    %v208 = vadd.f32 0.0, %v207
    %v209 = vpop.f32.mrf.mxu0
    %210 = vdwg.mxu0
    %v211 = vmul.f32 %v208, 0.25
    %v212 = vsel %vm132, %v211, -inf
    %vm213 = vcmask 64512
    %v214 = vsel %vm213, %v212, -inf
    %v215 = vrot.slane %v214, 4
    %v216 = vmax.f32 %v214, %v215
    %v217 = vrot.slane %v216, 2
    %v218 = vmax.f32 %v216, %v217
    %v219 = vrot.slane %v218, 1
    %v220 = vmax.f32 %v218, %v219
    %v221 = vsub.f32 %v212, %v220
    %v222 = vmul.f32 %v221, 1.442695
    %v223 = vpow.pop %v222
    %v224 = vsel %vm213, %v223, 0.0
    %v225 = vrot.slane %v224, 4
    %v226 = vadd.f32 %v224, %v225
    %v227 = vrot.slane %v226, 2
    %v228 = vadd.f32 %v226, %v227
    %v229 = vrot.slane %v228, 1
    %v230 = vadd.f32 %v228, %v229
    %v231 = vrcp.pop %v230
    %v232 = vmul.f32 %v223, %v231
    %233 = vrot.lane.b32.xlu0 %v120, 96
    %v234 = vpop.permute.xlu0 %233
    %v237 = vsel %vm213, %v232, 0
    %239 = vmatprep.subr.mxu0 0.0
    %240 = vmatpush1.msra.mxu0 0.0
    %241 = vmatprep.subr.mxu0 0.0
    %242 = vmatpush1.msra.mxu0 0.0
    %243 = vmatprep.subr.mxu0 0.0
    %244 = vmatpush1.msra.mxu0 0.0
    %245 = vmatprep.subr.mxu0 0.0
    %246 = vmatpush1.msra.mxu0 0.0
    %247 = vmatprep.subr.mxu0 0.0
    %248 = vmatpush1.msra.mxu0 0.0
    %249 = vmatprep.subr.mxu0 0.0
    %250 = vmatpush1.msra.mxu0 0.0
    %251 = vmatprep.subr.mxu0 0.0
    %252 = vmatpush1.msra.mxu0 0.0
    %253 = vmatprep.subr.mxu0 0.0
    %254 = vmatpush1.msra.mxu0 0.0
    %255 = vmatprep.subr.mxu0 0.0
    %256 = vmatpush1.msra.mxu0 0.0
    %257 = vmatprep.subr.mxu0 0.0
    %258 = vmatpush1.msra.mxu0 0.0
    %259 = vmatprep.subr.mxu0 0.0
    %260 = vmatpush1.msra.mxu0 0.0
    %261 = vmatprep.subr.mxu0 0.0
    %262 = vmatpush1.msra.mxu0 0.0
    %263 = vmatprep.subr.mxu0 0.0
    %264 = vmatpush1.msra.mxu0 0.0
    %265 = vmatprep.subr.mxu0 0.0
    %266 = vmatpush1.msra.mxu0 0.0
    %267 = vmatprep.subr.mxu0 0.0
    %268 = vmatpush1.msra.mxu0 0.0
    %269 = vmatprep.subr.mxu0 0.0
    %270 = vmatpush1.msra.mxu0 %v234
    %271 = vmatprep.subr.mxu0 0.0
    %272 = vmatpush2.msra.mxu0 0.0
    %273 = vmatprep.subr.mxu0 0.0
    %274 = vmatpush2.msra.mxu0 0.0
    %275 = vmatprep.subr.mxu0 0.0
    %276 = vmatpush2.msra.mxu0 0.0
    %277 = vmatprep.subr.mxu0 0.0
    %278 = vmatpush2.msra.mxu0 0.0
    %279 = vmatprep.subr.mxu0 0.0
    %280 = vmatpush2.msra.mxu0 0.0
    %281 = vmatprep.subr.mxu0 0.0
    %282 = vmatpush2.msra.mxu0 0.0
    %283 = vmatprep.subr.mxu0 0.0
    %284 = vmatpush2.msra.mxu0 0.0
    %285 = vmatprep.subr.mxu0 0.0
    %286 = vmatpush2.msra.mxu0 0.0
    %287 = vmatprep.subr.mxu0 0.0
    %288 = vmatpush2.msra.mxu0 0.0
    %289 = vmatprep.subr.mxu0 0.0
    %290 = vmatpush2.msra.mxu0 0.0
    %291 = vmatprep.subr.mxu0 0.0
    %292 = vmatpush2.msra.mxu0 0.0
    %293 = vmatprep.subr.mxu0 0.0
    %294 = vmatpush2.msra.mxu0 0.0
    %295 = vmatprep.subr.mxu0 0.0
    %296 = vmatpush2.msra.mxu0 0.0
    %297 = vmatprep.subr.mxu0 0.0
    %298 = vmatpush2.msra.mxu0 0.0
    %299 = vmatprep.subr.mxu0 0.0
    %300 = vmatpush2.msra.mxu0 0.0
    %301 = vmatprep.subr.mxu0 0.0
    %302 = vmatpush2.msra.mxu0 0.0
    %303 = vmatprep.mubr.f32.mxu0 0.0
    %304 = vmatmul.mubr.f32.gmra.mxu0 %v237
    %v305 = vpop.f32.mrf.mxu0
    %v306 = vadd.f32 0.0, %v305
    %v307 = vpop.f32.mrf.mxu0
    %308 = vdwg.mxu0
    %310 = vrot.lane.b32.xlu0 %v125, 112
    %v311 = vpop.permute.xlu0 %310
    %v312 = vsel %vm136, %v311, 0
    %v314 = vsel %vm136, %v125, 0
    %316 = vmatprep.subr.mxu0 0.0
    %317 = vmatpush1.xpose.msra.mxu0 0.0
    %318 = vmatprep.subr.mxu0 0.0
    %319 = vmatpush1.xpose.msra.mxu0 0.0
    %320 = vmatprep.subr.mxu0 0.0
    %321 = vmatpush1.xpose.msra.mxu0 0.0
    %322 = vmatprep.subr.mxu0 0.0
    %323 = vmatpush1.xpose.msra.mxu0 0.0
    %324 = vmatprep.subr.mxu0 0.0
    %325 = vmatpush1.xpose.msra.mxu0 0.0
    %326 = vmatprep.subr.mxu0 0.0
    %327 = vmatpush1.xpose.msra.mxu0 0.0
    %328 = vmatprep.subr.mxu0 0.0
    %329 = vmatpush1.xpose.msra.mxu0 0.0
    %330 = vmatprep.subr.mxu0 0.0
    %331 = vmatpush1.xpose.msra.mxu0 0.0
    %332 = vmatprep.subr.mxu0 0.0
    %333 = vmatpush1.xpose.msra.mxu0 0.0
    %334 = vmatprep.subr.mxu0 0.0
    %335 = vmatpush1.xpose.msra.mxu0 0.0
    %336 = vmatprep.subr.mxu0 0.0
    %337 = vmatpush1.xpose.msra.mxu0 0.0
    %338 = vmatprep.subr.mxu0 0.0
    %339 = vmatpush1.xpose.msra.mxu0 0.0
    %340 = vmatprep.subr.mxu0 0.0
    %341 = vmatpush1.xpose.msra.mxu0 0.0
    %342 = vmatprep.subr.mxu0 0.0
    %343 = vmatpush1.xpose.msra.mxu0 0.0
    %344 = vmatprep.subr.mxu0 0.0
    %345 = vmatpush1.xpose.msra.mxu0 0.0
    %346 = vmatprep.subr.mxu0 0.0
    %347 = vmatpush1.xpose.msra.mxu0 %v314
    %348 = vmatprep.subr.mxu0 0.0
    %349 = vmatpush2.xpose.msra.mxu0 0.0
    %350 = vmatprep.subr.mxu0 0.0
    %351 = vmatpush2.xpose.msra.mxu0 0.0
    %352 = vmatprep.subr.mxu0 0.0
    %353 = vmatpush2.xpose.msra.mxu0 0.0
    %354 = vmatprep.subr.mxu0 0.0
    %355 = vmatpush2.xpose.msra.mxu0 0.0
    %356 = vmatprep.subr.mxu0 0.0
    %357 = vmatpush2.xpose.msra.mxu0 0.0
    %358 = vmatprep.subr.mxu0 0.0
    %359 = vmatpush2.xpose.msra.mxu0 0.0
    %360 = vmatprep.subr.mxu0 0.0
    %361 = vmatpush2.xpose.msra.mxu0 0.0
    %362 = vmatprep.subr.mxu0 0.0
    %363 = vmatpush2.xpose.msra.mxu0 0.0
    %364 = vmatprep.subr.mxu0 0.0
    %365 = vmatpush2.xpose.msra.mxu0 0.0
    %366 = vmatprep.subr.mxu0 0.0
    %367 = vmatpush2.xpose.msra.mxu0 0.0
    %368 = vmatprep.subr.mxu0 0.0
    %369 = vmatpush2.xpose.msra.mxu0 0.0
    %370 = vmatprep.subr.mxu0 0.0
    %371 = vmatpush2.xpose.msra.mxu0 0.0
    %372 = vmatprep.subr.mxu0 0.0
    %373 = vmatpush2.xpose.msra.mxu0 0.0
    %374 = vmatprep.subr.mxu0 0.0
    %375 = vmatpush2.xpose.msra.mxu0 0.0
    %376 = vmatprep.subr.mxu0 0.0
    %377 = vmatpush2.xpose.msra.mxu0 0.0
    %378 = vmatprep.subr.mxu0 0.0
    %379 = vmatpush2.xpose.msra.mxu0 0.0
    %380 = vmatprep.mubr.f32.mxu0 0.0
    %381 = vmatmul.mubr.f32.gmra.mxu0 %v312
    %v382 = vpop.f32.mrf.mxu0
    %v383 = vadd.f32 0.0, %v382
    %v384 = vpop.f32.mrf.mxu0
    %385 = vdwg.mxu0
    %v386 = vmul.f32 %v383, 0.25
    %v387 = vsel %vm132, %v386, -inf
    %v388 = vsel %vm213, %v387, -inf
    %v389 = vrot.slane %v388, 4
    %v390 = vmax.f32 %v388, %v389
    %v391 = vrot.slane %v390, 2
    %v392 = vmax.f32 %v390, %v391
    %v393 = vrot.slane %v392, 1
    %v394 = vmax.f32 %v392, %v393
    %v395 = vsub.f32 %v387, %v394
    %v396 = vmul.f32 %v395, 1.442695
    %v397 = vpow.pop %v396
    %v398 = vsel %vm213, %v397, 0.0
    %v399 = vrot.slane %v398, 4
    %v400 = vadd.f32 %v398, %v399
    %v401 = vrot.slane %v400, 2
    %v402 = vadd.f32 %v400, %v401
    %v403 = vrot.slane %v402, 1
    %v404 = vadd.f32 %v402, %v403
    %v405 = vrcp.pop %v404
    %v406 = vmul.f32 %v397, %v405
    %407 = vrot.lane.b32.xlu0 %v125, 96
    %v408 = vpop.permute.xlu0 %407
    %v411 = vsel %vm213, %v406, 0
    %413 = vmatprep.subr.mxu0 0.0
    %414 = vmatpush1.msra.mxu0 0.0
    %415 = vmatprep.subr.mxu0 0.0
    %416 = vmatpush1.msra.mxu0 0.0
    %417 = vmatprep.subr.mxu0 0.0
    %418 = vmatpush1.msra.mxu0 0.0
    %419 = vmatprep.subr.mxu0 0.0
    %420 = vmatpush1.msra.mxu0 0.0
    %421 = vmatprep.subr.mxu0 0.0
    %422 = vmatpush1.msra.mxu0 0.0
    %423 = vmatprep.subr.mxu0 0.0
    %424 = vmatpush1.msra.mxu0 0.0
    %425 = vmatprep.subr.mxu0 0.0
    %426 = vmatpush1.msra.mxu0 0.0
    %427 = vmatprep.subr.mxu0 0.0
    %428 = vmatpush1.msra.mxu0 0.0
    %429 = vmatprep.subr.mxu0 0.0
    %430 = vmatpush1.msra.mxu0 0.0
    %431 = vmatprep.subr.mxu0 0.0
    %432 = vmatpush1.msra.mxu0 0.0
    %433 = vmatprep.subr.mxu0 0.0
    %434 = vmatpush1.msra.mxu0 0.0
    %435 = vmatprep.subr.mxu0 0.0
    %436 = vmatpush1.msra.mxu0 0.0
    %437 = vmatprep.subr.mxu0 0.0
    %438 = vmatpush1.msra.mxu0 0.0
    %439 = vmatprep.subr.mxu0 0.0
    %440 = vmatpush1.msra.mxu0 0.0
    %441 = vmatprep.subr.mxu0 0.0
    %442 = vmatpush1.msra.mxu0 0.0
    %443 = vmatprep.subr.mxu0 0.0
    %444 = vmatpush1.msra.mxu0 %v408
    %445 = vmatprep.subr.mxu0 0.0
    %446 = vmatpush2.msra.mxu0 0.0
    %447 = vmatprep.subr.mxu0 0.0
    %448 = vmatpush2.msra.mxu0 0.0
    %449 = vmatprep.subr.mxu0 0.0
    %450 = vmatpush2.msra.mxu0 0.0
    %451 = vmatprep.subr.mxu0 0.0
    %452 = vmatpush2.msra.mxu0 0.0
    %453 = vmatprep.subr.mxu0 0.0
    %454 = vmatpush2.msra.mxu0 0.0
    %455 = vmatprep.subr.mxu0 0.0
    %456 = vmatpush2.msra.mxu0 0.0
    %457 = vmatprep.subr.mxu0 0.0
    %458 = vmatpush2.msra.mxu0 0.0
    %459 = vmatprep.subr.mxu0 0.0
    %460 = vmatpush2.msra.mxu0 0.0
    %461 = vmatprep.subr.mxu0 0.0
    %462 = vmatpush2.msra.mxu0 0.0
    %463 = vmatprep.subr.mxu0 0.0
    %464 = vmatpush2.msra.mxu0 0.0
    %465 = vmatprep.subr.mxu0 0.0
    %466 = vmatpush2.msra.mxu0 0.0
    %467 = vmatprep.subr.mxu0 0.0
    %468 = vmatpush2.msra.mxu0 0.0
    %469 = vmatprep.subr.mxu0 0.0
    %470 = vmatpush2.msra.mxu0 0.0
    %471 = vmatprep.subr.mxu0 0.0
    %472 = vmatpush2.msra.mxu0 0.0
    %473 = vmatprep.subr.mxu0 0.0
    %474 = vmatpush2.msra.mxu0 0.0
    %475 = vmatprep.subr.mxu0 0.0
    %476 = vmatpush2.msra.mxu0 0.0
    %477 = vmatprep.mubr.f32.mxu0 0.0
    %478 = vmatmul.mubr.f32.gmra.mxu0 %v411
    %v479 = vpop.f32.mrf.mxu0
    %v480 = vadd.f32 0.0, %v479
    %v481 = vpop.f32.mrf.mxu0
    %482 = vdwg.mxu0
    %483 = vst.msk [vmem:[#allocation7] sm:$0xff] %vm136, %v306
    %484 = vst.msk [vmem:[#allocation7 + $0x8] sm:$0xff] %vm136, %v480
    // Predicated region
    $region18: #{tpu_custom_call.1} parent=1 // pred_check
      _
    $region19: #{tpu_custom_call.1} parent=1 // pred_check_branch
      %486 = sbr.rel (0) target = $region21
    $region20: #{tpu_custom_call.1} parent=1 // pred_region
      %s488 = ssub.s32 256, 256
      %489 = vsyncadd [#allocation4], %s488
      %s490 = sshll.u32 [#allocation7], 4
      %s491 = int_to_ptr.vmem [resolvable:$true] %s490
      %496 = dma.vmem_to_hbm [thread:$0]  %s491, 256, %s2, [#allocation4], 128, 128, 8
    $region21: #{tpu_custom_call.1} parent=1 // pred_fallthru
      _
    // Predicated region
    $region22: #{tpu_custom_call.1} parent=1 // pred_check
      _
    $region23: #{tpu_custom_call.1} parent=1 // pred_check_branch
      %498 = sbr.rel (0) target = $region25
    $region24: #{tpu_custom_call.1} parent=1 // pred_region
      %499 = dma.done [#allocation4], 256
    $region25: #{tpu_custom_call.1} parent=1 // pred_fallthru
      _
    %500 = vsyncpa [#allocation3], 1
    %501 = vsyncpa [#allocation6], 1
    %502 = vsyncpa [#allocation4], 1

</llo_original>
